<compile_context>
chip_gen: v7x
topology: tpu7x:2x2x1
jax: 0.10.0
libtpu: 0.0.40
codegen_flags: <defaults>
</compile_context>

<pallas_src>
import functools

import jax
import jax.numpy as jnp
from jax.experimental import pallas as pl
from jax.experimental.pallas import tpu as pltpu


def round_up(x, m):
    return ((x + m - 1) // m) * m


# ----------------------------------------------------------------------------
# Pallas kernel 1: tiled matmul + bias (used for the one-time gates table and
# the hoisted fc/logits projection).  Fully "parallel" grid; K untiled.
# Operands are used at their incoming dtype (pass bf16 for MXU-native rate);
# accumulation is always f32.
# ----------------------------------------------------------------------------
def _matmul_bias_kernel(x_ref, w_ref, b_ref, o_ref):
    acc = jnp.dot(x_ref[...], w_ref[...], preferred_element_type=jnp.float32)
    o_ref[...] = (acc + b_ref[...]).astype(o_ref.dtype)


def matmul_bias_pallas(x, w, b, *, tm_max=256, tn_max=512):
    """x: (M, K), w: (K, N), b: (N,) or (1, N)  ->  (M, N) f32."""
    M, K = x.shape
    Kw, N = w.shape
    assert K == Kw

    Kp = round_up(K, 128)
    Mp = round_up(M, 8)
    tm = min(tm_max, Mp)           # tm_max=256 -> >=2 M blocks for v7x megacore
    Mp = round_up(Mp, tm)          # once M >= 512; harmless otherwise.
    Np = round_up(N, 128)
    tn = min(tn_max, Np)           # tn_max=512 keeps double-buffered tiles inside
    Np = round_up(Np, tn)          # v5e's 16 MiB default scoped VMEM.

    xp = jnp.pad(x, ((0, Mp - M), (0, Kp - K)))
    wp = jnp.pad(w, ((0, Kp - K), (0, Np - N)))
    bp = jnp.pad(jnp.reshape(b, (1, -1)).astype(jnp.float32), ((0, 0), (0, Np - N)))

    out = pl.pallas_call(
        _matmul_bias_kernel,
        out_shape=jax.ShapeDtypeStruct((Mp, Np), jnp.float32),
        grid_spec=pltpu.PrefetchScalarGridSpec(
            num_scalar_prefetch=0,
            grid=(Mp // tm, Np // tn),
            in_specs=[
                pl.BlockSpec((tm, Kp), lambda i, j: (i, 0)),
                pl.BlockSpec((Kp, tn), lambda i, j: (0, j)),
                pl.BlockSpec((1, tn), lambda i, j: (0, j)),
            ],
            out_specs=pl.BlockSpec((tm, tn), lambda i, j: (i, j)),
        ),
        compiler_params=pltpu.CompilerParams(
            dimension_semantics=("parallel", "parallel"),
        ),
    )(xp, wp, bp)
    return out[:M, :N]


# ----------------------------------------------------------------------------
# Pallas kernel 2: the serial LSTM recurrence.
# One grid step == TC timesteps (bounded-unroll inner loop).  Per step only the
# unavoidable  h @ W_hh^T  matmul (bf16 operands, f32 acc) plus f32 elementwise
# gate math runs; the x-part arrives precomputed as gates_x.  h/c carries live
# in f32 VMEM scratch across grid iterations.
# ----------------------------------------------------------------------------
def _lstm_chunk_kernel(gx_ref, whh_ref, h0_ref, c0_ref,
                       hs_ref, hout_ref, cout_ref,
                       h_sc, c_sc, *, t_real, needs_mask, unroll):
    t = pl.program_id(0)
    TC = gx_ref.shape[0]
    Hp = h_sc.shape[-1]

    @pl.when(t == 0)
    def _():
        h_sc[...] = h0_ref[...]
        c_sc[...] = c0_ref[...]

    def body(s, carry):
        h, c = carry
        # W_hh is read from the VMEM ref inside the dot (NOT hoisted into vregs
        # across the unrolled loop), keeping vreg pressure off the serial path.
        gates = gx_ref[s].astype(jnp.float32) + jnp.dot(
            h.astype(jnp.bfloat16), whh_ref[...],
            preferred_element_type=jnp.float32)
        # Hp is a multiple of 128 -> gate slices are lane-aligned (no relayout).
        i_g = jax.nn.sigmoid(gates[:, 0 * Hp:1 * Hp])
        f_g = jax.nn.sigmoid(gates[:, 1 * Hp:2 * Hp])
        g_g = jnp.tanh(gates[:, 2 * Hp:3 * Hp])
        o_g = jax.nn.sigmoid(gates[:, 3 * Hp:4 * Hp])
        c_new = f_g * c + i_g * g_g
        h_new = o_g * jnp.tanh(c_new)
        if needs_mask:  # static Python bool: only the tail chunk pays the select
            valid = (t * TC + s) < t_real
            h_new = jnp.where(valid, h_new, h)
            c_new = jnp.where(valid, c_new, c)
        hs_ref[s] = h_new.astype(hs_ref.dtype)
        return (h_new, c_new)

    h_fin, c_fin = jax.lax.fori_loop(0, TC, body, (h_sc[...], c_sc[...]),
                                     unroll=unroll)
    h_sc[...] = h_fin
    c_sc[...] = c_fin

    # Final-state writes only on the last grid step.
    @pl.when(t == pl.num_programs(0) - 1)
    def _():
        hout_ref[...] = h_fin
        cout_ref[...] = c_fin


def lstm_recurrence_pallas(gates_x, w_hh_t, h0, c0, *, max_chunk=32):
    """gates_x: (T, Bp, 4Hp) bf16, w_hh_t: (Hp, 4Hp) bf16, h0/c0: (Bp, Hp) f32.
    Returns (hs (T, Bp, Hp) bf16, h_n (Bp, Hp) f32, c_n (Bp, Hp) f32)."""
    T, Bp, G = gates_x.shape
    Hp = h0.shape[-1]
    assert G == 4 * Hp

    TC = min(T, max_chunk)
    n_chunks = pl.cdiv(T, TC)
    T_pad = n_chunks * TC
    if T_pad != T:
        gates_x = jnp.pad(gates_x, ((0, T_pad - T), (0, 0), (0, 0)))

    kernel = functools.partial(_lstm_chunk_kernel, t_real=T,
                               needs_mask=(T_pad != T), unroll=min(TC, 8))

    hs, h_n, c_n = pl.pallas_call(
        kernel,
        out_shape=(
            jax.ShapeDtypeStruct((T_pad, Bp, Hp), jnp.bfloat16),
            jax.ShapeDtypeStruct((Bp, Hp), jnp.float32),
            jax.ShapeDtypeStruct((Bp, Hp), jnp.float32),
        ),
        grid_spec=pltpu.PrefetchScalarGridSpec(
            num_scalar_prefetch=0,
            grid=(n_chunks,),
            in_specs=[
                pl.BlockSpec((TC, Bp, G), lambda t: (t, 0, 0)),   # gates_x chunk
                pl.BlockSpec((Hp, G), lambda t: (0, 0)),          # W_hh^T (bf16)
                pl.BlockSpec((Bp, Hp), lambda t: (0, 0)),         # h0
                pl.BlockSpec((Bp, Hp), lambda t: (0, 0)),         # c0
            ],
            out_specs=[
                pl.BlockSpec((TC, Bp, Hp), lambda t: (t, 0, 0)),  # all h_t
                pl.BlockSpec((Bp, Hp), lambda t: (0, 0)),         # h_n
                pl.BlockSpec((Bp, Hp), lambda t: (0, 0)),         # c_n
            ],
            scratch_shapes=[
                pltpu.VMEM((Bp, Hp), jnp.float32),                # h carry
                pltpu.VMEM((Bp, Hp), jnp.float32),                # c carry
            ],
        ),
        compiler_params=pltpu.CompilerParams(
            dimension_semantics=("arbitrary",),    # time is inherently serial
        ),
    )(gates_x, w_hh_t, h0, c0)
    return hs[:T], h_n, c_n


# ----------------------------------------------------------------------------
# Parameter preparation: pad to (8, 128)-friendly shapes (per-gate so in-kernel
# slices land on 128-lane boundaries), pre-transpose, cast matmul weights to
# bf16, and fold Embedding + input projection into a vocab-indexed table.
# ----------------------------------------------------------------------------
def prepare_params(raw):
    V, E = raw["embedding"].shape
    H = raw["w_hh"].shape[1]
    Hp = round_up(H, 128)
    Ep = round_up(E, 128)
    Vp = round_up(V, 128)

    # One-time: gates_table[v] = embedding[v] @ W_ih^T + (b_ih + b_hh)  (V, 4Hp)
    w_ih_g = jnp.pad(raw["w_ih"].reshape(4, H, E),
                     ((0, 0), (0, Hp - H), (0, Ep - E)))            # (4, Hp, Ep)
    w_ih_t_p = jnp.transpose(w_ih_g, (2, 0, 1)).reshape(Ep, 4 * Hp)
    b = raw["b_ih"] + raw["b_hh"]
    b_gates_p = jnp.pad(b.reshape(4, H), ((0, 0), (0, Hp - H))).reshape(1, 4 * Hp)
    embedding_p = jnp.pad(raw["embedding"], ((0, 0), (0, Ep - E)))  # (V, Ep)
    gates_table = matmul_bias_pallas(embedding_p, w_ih_t_p, b_gates_p)  # f32

    # W_hh (4H, H): pad gate rows and hidden columns, transpose to (Hp, 4Hp).
    w_hh_g = jnp.pad(raw["w_hh"].reshape(4, H, H),
                     ((0, 0), (0, Hp - H), (0, Hp - H)))            # (4, Hp, Hp)
    w_hh_t_p = jnp.transpose(w_hh_g, (2, 0, 1)).reshape(Hp, 4 * Hp)

    w_fc_t_p = jnp.pad(raw["w_fc"].T, ((0, Hp - H), (0, Vp - V)))   # (Hp, Vp)
    b_fc_p = jnp.pad(raw["b_fc"], (0, Vp - V)).reshape(1, Vp)

    return {
        "gates_table_p": gates_table.astype(jnp.bfloat16),   # (V, 4Hp)
        "w_hh_t_p": w_hh_t_p.astype(jnp.bfloat16),            # (Hp, 4Hp)
        "w_fc_t_p": w_fc_t_p.astype(jnp.bfloat16),             # (Hp, Vp)
        "b_fc_p": b_fc_p.astype(jnp.float32),                   # (1, Vp)
    }


# ----------------------------------------------------------------------------
# SentenceGenerator forward (JAX wrapper around the Pallas kernels).
# ----------------------------------------------------------------------------
def sentence_generator_forward(pp, x_tokens, prev_state):
    """x_tokens: (B, T) int32.  prev_state: (h0, c0) each (1, B, H).
    Returns (logits (B, T, V), (h_n, c_n) each (1, B, H))."""
    B, T = x_tokens.shape
    V = pp["gates_table_p"].shape[0]
    Hp = pp["w_hh_t_p"].shape[0]
    Vp = pp["w_fc_t_p"].shape[1]
    H = prev_state[0].shape[-1]
    Bp = round_up(B, 8)

    # (1) Input projection == a single gather of the precomputed table.  Only
    #     the tiny (B, T) int token array is transposed/padded.
    tok = jnp.pad(jnp.transpose(x_tokens), ((0, 0), (0, Bp - B)))   # (T, Bp)
    gates_x = pp["gates_table_p"][tok]                              # (T, Bp, 4Hp) bf16

    h0 = jnp.pad(prev_state[0][0].astype(jnp.float32), ((0, Bp - B), (0, Hp - H)))
    c0 = jnp.pad(prev_state[1][0].astype(jnp.float32), ((0, Bp - B), (0, Hp - H)))

    # (2) Serial recurrence: only h @ W_hh^T per step remains on the hot path.
    hs, h_n, c_n = lstm_recurrence_pallas(gates_x, pp["w_hh_t_p"], h0, c0)

    # (3) Output projection.  Transpose the SMALL bf16 hs tensor to batch-major
    #     so the fc matmul emits logits already in (B, T, V) layout (no HBM
    #     round trip of the largest B*T*V tensor).
    hs_bm = jnp.transpose(hs, (1, 0, 2)).reshape(Bp * T, Hp)        # bf16
    logits_p = matmul_bias_pallas(hs_bm, pp["w_fc_t_p"], pp["b_fc_p"])
    logits = logits_p.reshape(Bp, T, Vp)[:B, :, :V]

    return logits, (h_n[:B, :H][None, :, :], c_n[:B, :H][None, :, :])


# ----------------------------------------------------------------------------
# Pure-JAX f32 reference (mirrors torch.nn.LSTM semantics) for validation.
# ----------------------------------------------------------------------------
def reference_forward(raw, x_tokens, prev_state):
    feature = raw["embedding"][x_tokens]                 # (B, T, E)
    h = prev_state[0][0]
    c = prev_state[1][0]
    H = h.shape[-1]
    w_ih_t = raw["w_ih"].T
    w_hh_t = raw["w_hh"].T
    b = (raw["b_ih"] + raw["b_hh"])[None, :]

    def step(carry, x_t):
        h, c = carry
        gates = x_t @ w_ih_t + h @ w_hh_t + b
        i = jax.nn.sigmoid(gates[:, 0:H])
        f = jax.nn.sigmoid(gates[:, H:2 * H])
        g = jnp.tanh(gates[:, 2 * H:3 * H])
        o = jax.nn.sigmoid(gates[:, 3 * H:4 * H])
        c_new = f * c + i * g
        h_new = o * jnp.tanh(c_new)
        return (h_new, c_new), h_new

    (h_n, c_n), hs = jax.lax.scan(step, (h, c), jnp.transpose(feature, (1, 0, 2)))
    logits = jnp.einsum("tbh,vh->tbv", hs, raw["w_fc"]) + raw["b_fc"]
    return jnp.transpose(logits, (1, 0, 2)), (h_n[None], c_n[None])


# ----------------------------------------------------------------------------
# Deterministic parameter construction (PyTorch shapes).
# ----------------------------------------------------------------------------
def init_params(key, n_vocab, embedding_size, lstm_size):
    ks = jax.random.split(key, 7)
    scale = 0.1
    H = lstm_size
    return {
        "embedding": jax.random.normal(ks[6], (n_vocab, embedding_size), jnp.float32),
        "w_ih": scale * jax.random.normal(ks[0], (4 * H, embedding_size), jnp.float32),
        "w_hh": scale * jax.random.normal(ks[1], (4 * H, H), jnp.float32),
        "b_ih": scale * jax.random.normal(ks[2], (4 * H,), jnp.float32),
        "b_hh": scale * jax.random.normal(ks[3], (4 * H,), jnp.float32),
        "w_fc": scale * jax.random.normal(ks[4], (n_vocab, H), jnp.float32),
        "b_fc": scale * jax.random.normal(ks[5], (n_vocab,), jnp.float32),
    }


if __name__ == "__main__":
    # Small shapes consistent with the module's forward.
    n_vocab, seq_len, embedding_size, lstm_size = 64, 8, 32, 32
    batch = 2

    key = jax.random.PRNGKey(0)
    k_params, k_tokens = jax.random.split(key)

    raw = init_params(k_params, n_vocab, embedding_size, lstm_size)
    pp = prepare_params(raw)

    x_tokens = jax.random.randint(k_tokens, (batch, seq_len), 0, n_vocab, jnp.int32)

    # zero_state(batch) -> (zeros(1, B, H), zeros(1, B, H))
    prev_state = (jnp.zeros((1, batch, lstm_size), jnp.float32),
                  jnp.zeros((1, batch, lstm_size), jnp.float32))

    fwd = jax.jit(functools.partial(sentence_generator_forward, pp))
    logits, (h_n, c_n) = fwd(x_tokens, prev_state)
    jax.block_until_ready((logits, h_n, c_n))

    # Validate against a pure-JAX f32 reference of the same math.
    # bf16 matmul operands (f32 accumulation) -> relaxed tolerances.
    ref_logits, (ref_h, ref_c) = reference_forward(raw, x_tokens, prev_state)
    assert logits.shape == (batch, seq_len, n_vocab)
    assert h_n.shape == (1, batch, lstm_size) and c_n.shape == (1, batch, lstm_size)
    assert jnp.allclose(logits, ref_logits, atol=3e-2, rtol=3e-2)
    assert jnp.allclose(h_n, ref_h, atol=3e-2, rtol=3e-2)
    assert jnp.allclose(c_n, ref_c, atol=3e-2, rtol=3e-2)

    print("KERNEL_OK")
</pallas_src>

<mosaic_0001>
module attributes {stable_mosaic.version = 11 : i64} {
  func.func @_matmul_bias_kernel(%arg0: i32, %arg1: i32, %arg2: memref<64x128xf32, #tpu.memory_space<vmem>>, %arg3: memref<128x512xf32, #tpu.memory_space<vmem>>, %arg4: memref<1x512xf32, #tpu.memory_space<vmem>>, %arg5: memref<64x512xf32, #tpu.memory_space<vmem>>) attributes {dimension_semantics = [#tpu.dimension_semantics<parallel>, #tpu.dimension_semantics<parallel>], iteration_bounds = array<i64: 1, 1>, scalar_prefetch = 0 : i64, scratch_operands = 0 : i64, tpu.core_type = #tpu.core_type<tc>, window_params = [{transform_indices = @transform_0, window_bounds = array<i64: 64, 128>}, {transform_indices = @transform_1, window_bounds = array<i64: 128, 512>}, {transform_indices = @transform_2, window_bounds = array<i64: 1, 512>}, {transform_indices = @transform_3, window_bounds = array<i64: 64, 512>}]} {
    %c0 = arith.constant 0 : index
    %c0_0 = arith.constant 0 : index
    %0 = vector.load %arg2[%c0, %c0_0] : memref<64x128xf32, #tpu.memory_space<vmem>>, vector<64x128xf32>
    %c0_1 = arith.constant 0 : index
    %c0_2 = arith.constant 0 : index
    %1 = vector.load %arg3[%c0_1, %c0_2] : memref<128x512xf32, #tpu.memory_space<vmem>>, vector<128x512xf32>
    %cst = arith.constant dense<0.000000e+00> : vector<64x512xf32>
    %2 = tpu.matmul %0, %1, %cst {dimension_numbers = #tpu.dot_dimension_numbers<[1], [0], [0], [1], [0, 0, 1, 1], [], []>} : vector<64x128xf32>, vector<128x512xf32>, vector<64x512xf32> -> vector<64x512xf32>
    %c0_3 = arith.constant 0 : index
    %c0_4 = arith.constant 0 : index
    %3 = vector.load %arg4[%c0_3, %c0_4] : memref<1x512xf32, #tpu.memory_space<vmem>>, vector<1x512xf32>
    %4 = vector.broadcast %3 : vector<1x512xf32> to vector<64x512xf32>
    %5 = arith.addf %2, %4 : vector<64x512xf32>
    %c0_5 = arith.constant 0 : index
    %c0_6 = arith.constant 0 : index
    %6 = vector.load %arg5[%c0_5, %c0_6] : memref<64x512xf32, #tpu.memory_space<vmem>>, vector<64x512xf32>
    tpu.vector_store %arg5[%c0_5, %c0_6], %5 {strides = array<i32>} : memref<64x512xf32, #tpu.memory_space<vmem>>, vector<64x512xf32>,
    return
  }
  func.func @transform_0(%arg0: i32, %arg1: i32) -> (i32, i32) {
    %c0_i32 = arith.constant 0 : i32
    %c0_i32_0 = arith.constant 0 : i32
    return %arg0, %c0_i32 : i32, i32
  }
  func.func @transform_1(%arg0: i32, %arg1: i32) -> (i32, i32) {
    %c0_i32 = arith.constant 0 : i32
    %c0_i32_0 = arith.constant 0 : i32
    return %c0_i32, %arg1 : i32, i32
  }
  func.func @transform_2(%arg0: i32, %arg1: i32) -> (i32, i32) {
    %c0_i32 = arith.constant 0 : i32
    %c0_i32_0 = arith.constant 0 : i32
    return %c0_i32, %arg1 : i32, i32
  }
  func.func @transform_3(%arg0: i32, %arg1: i32) -> (i32, i32) {
    %c0_i32 = arith.constant 0 : i32
    return %arg0, %arg1 : i32, i32
  }
}

</mosaic_0001>

<llo_original>
// kernel: tpu_custom_call.1
$region0: #{tpu_custom_call.1}
  #allocation0 [shape = 'u32[]', space=smem, size = 0x4, offset = 0x4, fixed_abs, tag = 'smem constant byte address 0x4 - core index']
  #allocation1 [shape = 'u32[144,128]{1,0:T(1,128)}', space=vmem, size = 0x12000, scoped, tag = 'internal scratch']
  %s0 = inlined_call_operand.hbm [shape: f32[64,128], index: 0, kind: input, shape index: {}]
  %s1 = inlined_call_operand.hbm [shape: f32[128,512], index: 1, kind: input, shape index: {}]
  %s2 = inlined_call_operand.vmem [shape: f32[1,512], index: 2, kind: input, shape index: {}]
  %s3 = inlined_call_operand.hbm [shape: f32[64,512], index: 3, kind: output, shape index: {}]
  %s4 = sld [smem:[#allocation0]]
  $region30: #{tpu_custom_call.1} parent=0
    _
  %s6 = ssub.s32 1, %s4
  %s7 = scalar_select 0, %s6, %s4
  $region1: #{tpu_custom_call.1} parent=0
    #allocation2 [shape = 'u8[32768]{0}', space=vmem, size = 0x8000, scoped, tag = 'input window, operand 0, single buffered']
    #allocation3 [shape = 's32[1]{0}', space=sflag, size = 0x4, scoped, tag = 'scoped memory for tpu_custom_call.1']
    #allocation4 [shape = 's32[1]{0}', space=sflag, size = 0x4, scoped, tag = 'scoped memory for tpu_custom_call.1']
    #allocation5 [shape = 'u8[262144]{0}', space=vmem, size = 0x40000, scoped, tag = 'input window, operand 1, single buffered']
    #allocation6 [shape = 's32[1]{0}', space=sflag, size = 0x4, scoped, tag = 'scoped memory for tpu_custom_call.1']
    #allocation7 [shape = 'u8[131072]{0}', space=vmem, size = 0x20000, scoped, tag = 'output window, operand 0, single buffered']
    %8 = vsyncpa [#allocation3], 0
    %9 = vsyncpa [#allocation6], 0
    %10 = vsyncpa [#allocation4], 0
    // Predicated region
    $region2: #{tpu_custom_call.1} parent=1 // pred_check
      _
    $region3: #{tpu_custom_call.1} parent=1 // pred_check_branch
      %12 = sbr.rel (0) target = $region5
    $region4: #{tpu_custom_call.1} parent=1 // pred_region
      %s14 = ssub.s32 1024, 1024
      %15 = vsyncadd [#allocation3], %s14
      %s16 = sshll.u32 [#allocation2], 4
      %s17 = int_to_ptr.vmem [resolvable:$true] %s16
      %22 = dma.hbm_to_vmem [thread:$0]  %s0, 1024, %s17, [#allocation3], 128, 128, 8
    $region5: #{tpu_custom_call.1} parent=1 // pred_fallthru
      _
    // Predicated region
    $region6: #{tpu_custom_call.1} parent=1 // pred_check
      _
    $region7: #{tpu_custom_call.1} parent=1 // pred_check_branch
      %24 = sbr.rel (0) target = $region9
    $region8: #{tpu_custom_call.1} parent=1 // pred_region
      %s26 = ssub.s32 8192, 8192
      %27 = vsyncadd [#allocation6], %s26
      %s28 = sshll.u32 [#allocation5], 4
      %s29 = int_to_ptr.vmem [resolvable:$true] %s28
      %34 = dma.hbm_to_vmem [thread:$0]  %s1, 8192, %s29, [#allocation6], 512, 512, 32
    $region9: #{tpu_custom_call.1} parent=1 // pred_fallthru
      _
    // Predicated region
    $region10: #{tpu_custom_call.1} parent=1 // pred_check
      _
    $region11: #{tpu_custom_call.1} parent=1 // pred_check_branch
      %36 = sbr.rel (0) target = $region13
    $region12: #{tpu_custom_call.1} parent=1 // pred_region
      _
    $region13: #{tpu_custom_call.1} parent=1 // pred_fallthru
      _
    // Predicated region
    $region14: #{tpu_custom_call.1} parent=1 // pred_check
      _
    $region15: #{tpu_custom_call.1} parent=1 // pred_check_branch
      %38 = sbr.rel (0) target = $region17
    $region16: #{tpu_custom_call.1} parent=1 // pred_region
      %39 = dma.done [#allocation3], 1024
    $region17: #{tpu_custom_call.1} parent=1 // pred_fallthru
      _
    // Predicated region
    $region18: #{tpu_custom_call.1} parent=1 // pred_check
      _
    $region19: #{tpu_custom_call.1} parent=1 // pred_check_branch
      %41 = sbr.rel (0) target = $region21
    $region20: #{tpu_custom_call.1} parent=1 // pred_region
      %42 = dma.done [#allocation6], 8192
    $region21: #{tpu_custom_call.1} parent=1 // pred_fallthru
      _
    %v43 = vld [vmem:[#allocation2] sm:$0xff]
    %v44 = vld [vmem:[#allocation2 + $0x8] sm:$0xff]
    %v45 = vld [vmem:[#allocation2 + $0x10] sm:$0xff]
    %v46 = vld [vmem:[#allocation2 + $0x18] sm:$0xff]
    %v47 = vld [vmem:[#allocation2 + $0x20] sm:$0xff]
    %v48 = vld [vmem:[#allocation2 + $0x28] sm:$0xff]
    %v49 = vld [vmem:[#allocation2 + $0x30] sm:$0xff]
    %v50 = vld [vmem:[#allocation2 + $0x38] sm:$0xff]
    %v51 = vld [vmem:[#allocation5] sm:$0xff]
    %v52 = vld [vmem:[#allocation5 + $0x8] sm:$0xff]
    %v53 = vld [vmem:[#allocation5 + $0x10] sm:$0xff]
    %v54 = vld [vmem:[#allocation5 + $0x18] sm:$0xff]
    %v55 = vld [vmem:[#allocation5 + $0x20] sm:$0xff]
    %v56 = vld [vmem:[#allocation5 + $0x28] sm:$0xff]
    %v57 = vld [vmem:[#allocation5 + $0x30] sm:$0xff]
    %v58 = vld [vmem:[#allocation5 + $0x38] sm:$0xff]
    %v59 = vld [vmem:[#allocation5 + $0x40] sm:$0xff]
    %v60 = vld [vmem:[#allocation5 + $0x48] sm:$0xff]
    %v61 = vld [vmem:[#allocation5 + $0x50] sm:$0xff]
    %v62 = vld [vmem:[#allocation5 + $0x58] sm:$0xff]
    %v63 = vld [vmem:[#allocation5 + $0x60] sm:$0xff]
    %v64 = vld [vmem:[#allocation5 + $0x68] sm:$0xff]
    %v65 = vld [vmem:[#allocation5 + $0x70] sm:$0xff]
    %v66 = vld [vmem:[#allocation5 + $0x78] sm:$0xff]
    %v67 = vld [vmem:[#allocation5 + $0x80] sm:$0xff]
    %v68 = vld [vmem:[#allocation5 + $0x88] sm:$0xff]
    %v69 = vld [vmem:[#allocation5 + $0x90] sm:$0xff]
    %v70 = vld [vmem:[#allocation5 + $0x98] sm:$0xff]
    %v71 = vld [vmem:[#allocation5 + $0xa0] sm:$0xff]
    %v72 = vld [vmem:[#allocation5 + $0xa8] sm:$0xff]
    %v73 = vld [vmem:[#allocation5 + $0xb0] sm:$0xff]
    %v74 = vld [vmem:[#allocation5 + $0xb8] sm:$0xff]
    %v75 = vld [vmem:[#allocation5 + $0xc0] sm:$0xff]
    %v76 = vld [vmem:[#allocation5 + $0xc8] sm:$0xff]
    %v77 = vld [vmem:[#allocation5 + $0xd0] sm:$0xff]
    %v78 = vld [vmem:[#allocation5 + $0xd8] sm:$0xff]
    %v79 = vld [vmem:[#allocation5 + $0xe0] sm:$0xff]
    %v80 = vld [vmem:[#allocation5 + $0xe8] sm:$0xff]
    %v81 = vld [vmem:[#allocation5 + $0xf0] sm:$0xff]
    %v82 = vld [vmem:[#allocation5 + $0xf8] sm:$0xff]
    %v83 = vld [vmem:[#allocation5 + $0x100] sm:$0xff]
    %v84 = vld [vmem:[#allocation5 + $0x108] sm:$0xff]
    %v85 = vld [vmem:[#allocation5 + $0x110] sm:$0xff]
    %v86 = vld [vmem:[#allocation5 + $0x118] sm:$0xff]
    %v87 = vld [vmem:[#allocation5 + $0x120] sm:$0xff]
    %v88 = vld [vmem:[#allocation5 + $0x128] sm:$0xff]
    %v89 = vld [vmem:[#allocation5 + $0x130] sm:$0xff]
    %v90 = vld [vmem:[#allocation5 + $0x138] sm:$0xff]
    %v91 = vld [vmem:[#allocation5 + $0x140] sm:$0xff]
    %v92 = vld [vmem:[#allocation5 + $0x148] sm:$0xff]
    %v93 = vld [vmem:[#allocation5 + $0x150] sm:$0xff]
    %v94 = vld [vmem:[#allocation5 + $0x158] sm:$0xff]
    %v95 = vld [vmem:[#allocation5 + $0x160] sm:$0xff]
    %v96 = vld [vmem:[#allocation5 + $0x168] sm:$0xff]
    %v97 = vld [vmem:[#allocation5 + $0x170] sm:$0xff]
    %v98 = vld [vmem:[#allocation5 + $0x178] sm:$0xff]
    %v99 = vld [vmem:[#allocation5 + $0x180] sm:$0xff]
    %v100 = vld [vmem:[#allocation5 + $0x188] sm:$0xff]
    %v101 = vld [vmem:[#allocation5 + $0x190] sm:$0xff]
    %v102 = vld [vmem:[#allocation5 + $0x198] sm:$0xff]
    %v103 = vld [vmem:[#allocation5 + $0x1a0] sm:$0xff]
    %v104 = vld [vmem:[#allocation5 + $0x1a8] sm:$0xff]
    %v105 = vld [vmem:[#allocation5 + $0x1b0] sm:$0xff]
    %v106 = vld [vmem:[#allocation5 + $0x1b8] sm:$0xff]
    %v107 = vld [vmem:[#allocation5 + $0x1c0] sm:$0xff]
    %v108 = vld [vmem:[#allocation5 + $0x1c8] sm:$0xff]
    %v109 = vld [vmem:[#allocation5 + $0x1d0] sm:$0xff]
    %v110 = vld [vmem:[#allocation5 + $0x1d8] sm:$0xff]
    %v111 = vld [vmem:[#allocation5 + $0x1e0] sm:$0xff]
    %v112 = vld [vmem:[#allocation5 + $0x1e8] sm:$0xff]
    %v113 = vld [vmem:[#allocation5 + $0x1f0] sm:$0xff]
    %v114 = vld [vmem:[#allocation5 + $0x1f8] sm:$0xff]
    %v115 = vld [vmem:[%s2] sm:$0xf]
    %v117 = vlaneseq
    %v118 = vshrl.u32 %v117, 7
    %v119 = vsub.s32 0, %v118
    %v120 = vrot.slane %v115, %v119
    %v121 = vlaneseq
    %v122 = vshrl.u32 %v121, 7
    %v123 = vsub.s32 1, %v122
    %v124 = vrot.slane %v115, %v123
    %v125 = vlaneseq
    %v126 = vshrl.u32 %v125, 7
    %v127 = vsub.s32 2, %v126
    %v128 = vrot.slane %v115, %v127
    %v129 = vlaneseq
    %v130 = vshrl.u32 %v129, 7
    %v131 = vsub.s32 3, %v130
    %v132 = vrot.slane %v115, %v131
    %137 = vmatprep.subr.mxu0 %v52
    %138 = vmatpush1.msra.mxu0 %v51
    %139 = vmatprep.subr.mxu0 %v56
    %140 = vmatpush1.msra.mxu0 %v55
    %141 = vmatprep.subr.mxu0 %v60
    %142 = vmatpush1.msra.mxu0 %v59
    %143 = vmatprep.subr.mxu0 %v64
    %144 = vmatpush1.msra.mxu0 %v63
    %145 = vmatprep.subr.mxu0 %v68
    %146 = vmatpush1.msra.mxu0 %v67
    %147 = vmatprep.subr.mxu0 %v72
    %148 = vmatpush1.msra.mxu0 %v71
    %149 = vmatprep.subr.mxu0 %v76
    %150 = vmatpush1.msra.mxu0 %v75
    %151 = vmatprep.subr.mxu0 %v80
    %152 = vmatpush1.msra.mxu0 %v79
    %153 = vmatprep.subr.mxu0 %v84
    %154 = vmatpush1.msra.mxu0 %v83
    %155 = vmatprep.subr.mxu0 %v88
    %156 = vmatpush1.msra.mxu0 %v87
    %157 = vmatprep.subr.mxu0 %v92
    %158 = vmatpush1.msra.mxu0 %v91
    %159 = vmatprep.subr.mxu0 %v96
    %160 = vmatpush1.msra.mxu0 %v95
    %161 = vmatprep.subr.mxu0 %v100
    %162 = vmatpush1.msra.mxu0 %v99
    %163 = vmatprep.subr.mxu0 %v104
    %164 = vmatpush1.msra.mxu0 %v103
    %165 = vmatprep.subr.mxu0 %v108
    %166 = vmatpush1.msra.mxu0 %v107
    %167 = vmatprep.subr.mxu0 %v112
    %168 = vmatpush1.msra.mxu0 %v111
    %169 = vmatprep.subr.mxu0 0.0
    %170 = vmatpush1.msra.mxu0 0.0
    %171 = vmatprep.subr.mxu0 0.0
    %172 = vmatpush1.msra.mxu0 0.0
    %173 = vmatprep.subr.mxu0 0.0
    %174 = vmatpush1.msra.mxu0 0.0
    %175 = vmatprep.subr.mxu0 0.0
    %176 = vmatpush1.msra.mxu0 0.0
    %177 = vmatprep.subr.mxu0 0.0
    %178 = vmatpush1.msra.mxu0 0.0
    %179 = vmatprep.subr.mxu0 0.0
    %180 = vmatpush1.msra.mxu0 0.0
    %181 = vmatprep.subr.mxu0 0.0
    %182 = vmatpush1.msra.mxu0 0.0
    %183 = vmatprep.subr.mxu0 0.0
    %184 = vmatpush1.msra.mxu0 0.0
    %185 = vmatprep.subr.mxu0 0.0
    %186 = vmatpush1.msra.mxu0 0.0
    %187 = vmatprep.subr.mxu0 0.0
    %188 = vmatpush1.msra.mxu0 0.0
    %189 = vmatprep.subr.mxu0 0.0
    %190 = vmatpush1.msra.mxu0 0.0
    %191 = vmatprep.subr.mxu0 0.0
    %192 = vmatpush1.msra.mxu0 0.0
    %193 = vmatprep.subr.mxu0 0.0
    %194 = vmatpush1.msra.mxu0 0.0
    %195 = vmatprep.subr.mxu0 0.0
    %196 = vmatpush1.msra.mxu0 0.0
    %197 = vmatprep.subr.mxu0 0.0
    %198 = vmatpush1.msra.mxu0 0.0
    %199 = vmatprep.subr.mxu0 0.0
    %200 = vmatpush1.msra.mxu0 0.0
    %201 = vmatprep.mubr.f32.mxu0 0.0
    %202 = vmatmul.mubr.f32.gmra.mrb[0].mxu0 %v43
    %v203 = vpop.f32.mrb[0].mxu0
    %v204 = vadd.f32 %v120, %v203
    %v205 = vpop.f32.mrb[0].mxu0
    %v206 = vadd.f32 %v124, %v205
    %207 = vmatprep.mubr.f32.mxu0 0.0
    %208 = vmatmul.mubr.f32.gmra.mrb[0].mxu0 %v44
    %v209 = vpop.f32.mrb[0].mxu0
    %v210 = vadd.f32 %v120, %v209
    %v211 = vpop.f32.mrb[0].mxu0
    %v212 = vadd.f32 %v124, %v211
    %213 = vmatprep.mubr.f32.mxu0 0.0
    %214 = vmatmul.mubr.f32.gmra.mrb[0].mxu0 %v45
    %v215 = vpop.f32.mrb[0].mxu0
    %v216 = vadd.f32 %v120, %v215
    %v217 = vpop.f32.mrb[0].mxu0
    %v218 = vadd.f32 %v124, %v217
    %219 = vmatprep.mubr.f32.mxu0 0.0
    %220 = vmatmul.mubr.f32.gmra.mrb[0].mxu0 %v46
    %v221 = vpop.f32.mrb[0].mxu0
    %v222 = vadd.f32 %v120, %v221
    %v223 = vpop.f32.mrb[0].mxu0
    %v224 = vadd.f32 %v124, %v223
    %225 = vmatprep.mubr.f32.mxu0 0.0
    %226 = vmatmul.mubr.f32.gmra.mrb[0].mxu0 %v47
    %v227 = vpop.f32.mrb[0].mxu0
    %v228 = vadd.f32 %v120, %v227
    %v229 = vpop.f32.mrb[0].mxu0
    %v230 = vadd.f32 %v124, %v229
    %231 = vmatprep.mubr.f32.mxu0 0.0
    %232 = vmatmul.mubr.f32.gmra.mrb[0].mxu0 %v48
    %v233 = vpop.f32.mrb[0].mxu0
    %v234 = vadd.f32 %v120, %v233
    %v235 = vpop.f32.mrb[0].mxu0
    %v236 = vadd.f32 %v124, %v235
    %237 = vmatprep.mubr.f32.mxu0 0.0
    %238 = vmatmul.mubr.f32.gmra.mrb[0].mxu0 %v49
    %v239 = vpop.f32.mrb[0].mxu0
    %v240 = vadd.f32 %v120, %v239
    %v241 = vpop.f32.mrb[0].mxu0
    %v242 = vadd.f32 %v124, %v241
    %243 = vmatprep.mubr.f32.mxu0 0.0
    %244 = vmatmul.mubr.f32.gmra.mrb[0].mxu0 %v50
    %v245 = vpop.f32.mrb[0].mxu0
    %v246 = vadd.f32 %v120, %v245
    %v247 = vpop.f32.mrb[0].mxu0
    %v248 = vadd.f32 %v124, %v247
    %249 = vdwg.mxu0
    %250 = vmatprep.subr.mxu0 %v54
    %251 = vmatpush1.msra.mxu0 %v53
    %252 = vmatprep.subr.mxu0 %v58
    %253 = vmatpush1.msra.mxu0 %v57
    %254 = vmatprep.subr.mxu0 %v62
    %255 = vmatpush1.msra.mxu0 %v61
    %256 = vmatprep.subr.mxu0 %v66
    %257 = vmatpush1.msra.mxu0 %v65
    %258 = vmatprep.subr.mxu0 %v70
    %259 = vmatpush1.msra.mxu0 %v69
    %260 = vmatprep.subr.mxu0 %v74
    %261 = vmatpush1.msra.mxu0 %v73
    %262 = vmatprep.subr.mxu0 %v78
    %263 = vmatpush1.msra.mxu0 %v77
    %264 = vmatprep.subr.mxu0 %v82
    %265 = vmatpush1.msra.mxu0 %v81
    %266 = vmatprep.subr.mxu0 %v86
    %267 = vmatpush1.msra.mxu0 %v85
    %268 = vmatprep.subr.mxu0 %v90
    %269 = vmatpush1.msra.mxu0 %v89
    %270 = vmatprep.subr.mxu0 %v94
    %271 = vmatpush1.msra.mxu0 %v93
    %272 = vmatprep.subr.mxu0 %v98
    %273 = vmatpush1.msra.mxu0 %v97
    %274 = vmatprep.subr.mxu0 %v102
    %275 = vmatpush1.msra.mxu0 %v101
    %276 = vmatprep.subr.mxu0 %v106
    %277 = vmatpush1.msra.mxu0 %v105
    %278 = vmatprep.subr.mxu0 %v110
    %279 = vmatpush1.msra.mxu0 %v109
    %280 = vmatprep.subr.mxu0 %v114
    %281 = vmatpush1.msra.mxu0 %v113
    %282 = vmatprep.subr.mxu0 0.0
    %283 = vmatpush1.msra.mxu0 0.0
    %284 = vmatprep.subr.mxu0 0.0
    %285 = vmatpush1.msra.mxu0 0.0
    %286 = vmatprep.subr.mxu0 0.0
    %287 = vmatpush1.msra.mxu0 0.0
    %288 = vmatprep.subr.mxu0 0.0
    %289 = vmatpush1.msra.mxu0 0.0
    %290 = vmatprep.subr.mxu0 0.0
    %291 = vmatpush1.msra.mxu0 0.0
    %292 = vmatprep.subr.mxu0 0.0
    %293 = vmatpush1.msra.mxu0 0.0
    %294 = vmatprep.subr.mxu0 0.0
    %295 = vmatpush1.msra.mxu0 0.0
    %296 = vmatprep.subr.mxu0 0.0
    %297 = vmatpush1.msra.mxu0 0.0
    %298 = vmatprep.subr.mxu0 0.0
    %299 = vmatpush1.msra.mxu0 0.0
    %300 = vmatprep.subr.mxu0 0.0
    %301 = vmatpush1.msra.mxu0 0.0
    %302 = vmatprep.subr.mxu0 0.0
    %303 = vmatpush1.msra.mxu0 0.0
    %304 = vmatprep.subr.mxu0 0.0
    %305 = vmatpush1.msra.mxu0 0.0
    %306 = vmatprep.subr.mxu0 0.0
    %307 = vmatpush1.msra.mxu0 0.0
    %308 = vmatprep.subr.mxu0 0.0
    %309 = vmatpush1.msra.mxu0 0.0
    %310 = vmatprep.subr.mxu0 0.0
    %311 = vmatpush1.msra.mxu0 0.0
    %312 = vmatprep.subr.mxu0 0.0
    %313 = vmatpush1.msra.mxu0 0.0
    %314 = vmatprep.mubr.f32.mxu0 0.0
    %315 = vmatmul.mubr.f32.gmra.mrb[0].mxu0 %v43
    %v316 = vpop.f32.mrb[0].mxu0
    %v317 = vadd.f32 %v128, %v316
    %v318 = vpop.f32.mrb[0].mxu0
    %v319 = vadd.f32 %v132, %v318
    %320 = vmatprep.mubr.f32.mxu0 0.0
    %321 = vmatmul.mubr.f32.gmra.mrb[0].mxu0 %v44
    %v322 = vpop.f32.mrb[0].mxu0
    %v323 = vadd.f32 %v128, %v322
    %v324 = vpop.f32.mrb[0].mxu0
    %v325 = vadd.f32 %v132, %v324
    %326 = vmatprep.mubr.f32.mxu0 0.0
    %327 = vmatmul.mubr.f32.gmra.mrb[0].mxu0 %v45
    %v328 = vpop.f32.mrb[0].mxu0
    %v329 = vadd.f32 %v128, %v328
    %v330 = vpop.f32.mrb[0].mxu0
    %v331 = vadd.f32 %v132, %v330
    %332 = vmatprep.mubr.f32.mxu0 0.0
    %333 = vmatmul.mubr.f32.gmra.mrb[0].mxu0 %v46
    %v334 = vpop.f32.mrb[0].mxu0
    %v335 = vadd.f32 %v128, %v334
    %v336 = vpop.f32.mrb[0].mxu0
    %v337 = vadd.f32 %v132, %v336
    %338 = vmatprep.mubr.f32.mxu0 0.0
    %339 = vmatmul.mubr.f32.gmra.mrb[0].mxu0 %v47
    %v340 = vpop.f32.mrb[0].mxu0
    %v341 = vadd.f32 %v128, %v340
    %v342 = vpop.f32.mrb[0].mxu0
    %v343 = vadd.f32 %v132, %v342
    %344 = vmatprep.mubr.f32.mxu0 0.0
    %345 = vmatmul.mubr.f32.gmra.mrb[0].mxu0 %v48
    %v346 = vpop.f32.mrb[0].mxu0
    %v347 = vadd.f32 %v128, %v346
    %v348 = vpop.f32.mrb[0].mxu0
    %v349 = vadd.f32 %v132, %v348
    %350 = vmatprep.mubr.f32.mxu0 0.0
    %351 = vmatmul.mubr.f32.gmra.mrb[0].mxu0 %v49
    %v352 = vpop.f32.mrb[0].mxu0
    %v353 = vadd.f32 %v128, %v352
    %v354 = vpop.f32.mrb[0].mxu0
    %v355 = vadd.f32 %v132, %v354
    %356 = vmatprep.mubr.f32.mxu0 0.0
    %357 = vmatmul.mubr.f32.gmra.mrb[0].mxu0 %v50
    %v358 = vpop.f32.mrb[0].mxu0
    %v359 = vadd.f32 %v128, %v358
    %v360 = vpop.f32.mrb[0].mxu0
    %v361 = vadd.f32 %v132, %v360
    %362 = vdwg.mxu0
    %363 = vst [vmem:[#allocation7] sm:$0xff] %v204
    %364 = vst [vmem:[#allocation7 + $0x8] sm:$0xff] %v206
    %365 = vst [vmem:[#allocation7 + $0x10] sm:$0xff] %v317
    %366 = vst [vmem:[#allocation7 + $0x18] sm:$0xff] %v319
    %367 = vst [vmem:[#allocation7 + $0x20] sm:$0xff] %v210
    %368 = vst [vmem:[#allocation7 + $0x28] sm:$0xff] %v212
    %369 = vst [vmem:[#allocation7 + $0x30] sm:$0xff] %v323
    %370 = vst [vmem:[#allocation7 + $0x38] sm:$0xff] %v325
    %371 = vst [vmem:[#allocation7 + $0x40] sm:$0xff] %v216
    %372 = vst [vmem:[#allocation7 + $0x48] sm:$0xff] %v218
    %373 = vst [vmem:[#allocation7 + $0x50] sm:$0xff] %v329
    %374 = vst [vmem:[#allocation7 + $0x58] sm:$0xff] %v331
    %375 = vst [vmem:[#allocation7 + $0x60] sm:$0xff] %v222
    %376 = vst [vmem:[#allocation7 + $0x68] sm:$0xff] %v224
    %377 = vst [vmem:[#allocation7 + $0x70] sm:$0xff] %v335
    %378 = vst [vmem:[#allocation7 + $0x78] sm:$0xff] %v337
    %379 = vst [vmem:[#allocation7 + $0x80] sm:$0xff] %v228
    %380 = vst [vmem:[#allocation7 + $0x88] sm:$0xff] %v230
    %381 = vst [vmem:[#allocation7 + $0x90] sm:$0xff] %v341
    %382 = vst [vmem:[#allocation7 + $0x98] sm:$0xff] %v343
    %383 = vst [vmem:[#allocation7 + $0xa0] sm:$0xff] %v234
    %384 = vst [vmem:[#allocation7 + $0xa8] sm:$0xff] %v236
    %385 = vst [vmem:[#allocation7 + $0xb0] sm:$0xff] %v347
    %386 = vst [vmem:[#allocation7 + $0xb8] sm:$0xff] %v349
    %387 = vst [vmem:[#allocation7 + $0xc0] sm:$0xff] %v240
    %388 = vst [vmem:[#allocation7 + $0xc8] sm:$0xff] %v242
    %389 = vst [vmem:[#allocation7 + $0xd0] sm:$0xff] %v353
    %390 = vst [vmem:[#allocation7 + $0xd8] sm:$0xff] %v355
    %391 = vst [vmem:[#allocation7 + $0xe0] sm:$0xff] %v246
    %392 = vst [vmem:[#allocation7 + $0xe8] sm:$0xff] %v248
    %393 = vst [vmem:[#allocation7 + $0xf0] sm:$0xff] %v359
    %394 = vst [vmem:[#allocation7 + $0xf8] sm:$0xff] %v361
    // Predicated region
    $region22: #{tpu_custom_call.1} parent=1 // pred_check
      _
    $region23: #{tpu_custom_call.1} parent=1 // pred_check_branch
      %396 = sbr.rel (0) target = $region25
    $region24: #{tpu_custom_call.1} parent=1 // pred_region
      %s398 = ssub.s32 4096, 4096
      %399 = vsyncadd [#allocation4], %s398
      %s400 = sshll.u32 [#allocation7], 4
      %s401 = int_to_ptr.vmem [resolvable:$true] %s400
      %406 = dma.vmem_to_hbm [thread:$0]  %s401, 4096, %s3, [#allocation4], 512, 512, 32
    $region25: #{tpu_custom_call.1} parent=1 // pred_fallthru
      _
    // Predicated region
    $region26: #{tpu_custom_call.1} parent=1 // pred_check
      _
    $region27: #{tpu_custom_call.1} parent=1 // pred_check_branch
      %408 = sbr.rel (0) target = $region29
    $region28: #{tpu_custom_call.1} parent=1 // pred_region
      %409 = dma.done [#allocation4], 4096
    $region29: #{tpu_custom_call.1} parent=1 // pred_fallthru
      _
    %410 = vsyncpa [#allocation3], 1
    %411 = vsyncpa [#allocation6], 1
    %412 = vsyncpa [#allocation4], 1

</llo_original>
